<compile_context>
chip_gen: v7x
topology: tpu7x:2x2x1
jax: 0.10.0
libtpu: 0.0.40
codegen_flags: <defaults>
</compile_context>

<pallas_src>
import math
import jax
import jax.numpy as jnp
from jax.experimental import pallas as pl
from jax.experimental.pallas import tpu as pltpu

NUM_HEADS = 4


def mha_kernel(x_ref, wqkv_ref, bqkv_ref, wp_ref, bp_ref, o_ref):
    x = x_ref[...]                                   # (TB, C)
    TB, C = x.shape
    H = NUM_HEADS
    D = C // H
    scale = 1.0 / math.sqrt(D)

    # Fused QKV projection: one (TB, C) @ (C, 3C) bf16 MXU pass, f32 accumulation.
    qkv = jnp.dot(x.astype(wqkv_ref.dtype), wqkv_ref[...],
                  preferred_element_type=jnp.float32) + bqkv_ref[...]    # (TB, 3C) f32

    # Static, lane-aligned 2-D head slices (no (TB, H, D) relayouts).
    q = [qkv[:, 0 * C + h * D:0 * C + (h + 1) * D] for h in range(H)]    # H x (TB, D)
    k = [qkv[:, 1 * C + h * D:1 * C + (h + 1) * D] for h in range(H)]
    v = [qkv[:, 2 * C + h * D:2 * C + (h + 1) * D] for h in range(H)]

    # Attention across heads, fully on VPU/XLU:
    #   s_ij  = <q_i, k_j> * scale          (elementwise mul + lane reduction)
    #   attn  = softmax_j(s_ij)             (exact divide; denom is (TB, 1))
    #   ctx_i = sum_j attn_ij * v_j         (broadcast FMA)
    # TODO(synk): nn.Dropout(0.1) on attn is identity at inference; training-mode
    # dropout with torch RNG semantics is not reproduced here.
    ctx_heads = []
    for i in range(H):
        s = [jnp.sum(q[i] * k[j], axis=-1, keepdims=True) * scale for j in range(H)]
        m = s[0]
        for j in range(1, H):
            m = jnp.maximum(m, s[j])
        e = [jnp.exp(sj - m) for sj in s]
        denom = e[0]
        for j in range(1, H):
            denom = denom + e[j]
        inv = 1.0 / denom                                             # exact, (TB, 1)
        ctx_i = (e[0] * inv) * v[0]
        for j in range(1, H):
            ctx_i = ctx_i + (e[j] * inv) * v[j]
        ctx_heads.append(ctx_i)                                       # (TB, D)
    ctx = jnp.concatenate(ctx_heads, axis=-1)                          # (TB, C) f32

    # Output projection: (TB, C) @ (C, C) bf16 MXU pass, f32 accumulation.
    out = jnp.dot(ctx.astype(wp_ref.dtype), wp_ref[...],
                  preferred_element_type=jnp.float32) + bp_ref[...]
    o_ref[...] = out.astype(o_ref.dtype)


def multi_head_attention(x, params, *, block_b=None, weight_dtype=jnp.bfloat16):
    """x: (B, C). params: (wqkv (C,3C), bqkv (1,3C), wp (C,C), bp (1,C))."""
    B, C = x.shape
    wqkv, bqkv, wp, bp = params

    # bf16 weights: native MXU dtype on v5e/v6e/v7x, halves weight VMEM/DMA bytes.
    # Accumulation stays f32 inside the kernel; biases stay f32.
    wqkv = wqkv.astype(weight_dtype)
    wp = wp.astype(weight_dtype)
    bqkv = bqkv.astype(jnp.float32)
    bp = bp.astype(jnp.float32)

    if block_b is None:
        # Multiple-of-8 divisors of B, largest first, capped at 128 (256-row tiles
        # spill heavily out of the 64-vreg file; v5e has a single vector-store slot).
        divisors = [c for c in (128, 64, 32, 16, 8) if c < B and B % c == 0]
        # Prefer >=4 grid steps (v7x megacore sharding + DMA/compute overlap),
        # fall back to >=2, else a single full-batch block.
        block_b = next((c for c in divisors if B // c >= 4),
                       divisors[0] if divisors else B)
    assert B % block_b == 0, "batch must be divisible by the batch tile"
    assert block_b == B or block_b % 8 == 0, "batch tile must be a multiple of 8"

    # Advisory cost estimate: two projections dominate; attention is O(B*C*H).
    flops = 2 * B * C * (3 * C) + 2 * B * C * C + 4 * B * C * NUM_HEADS
    w_bytes = (wqkv.size + wp.size) * jnp.dtype(weight_dtype).itemsize
    io_bytes = (x.size + B * C) * x.dtype.itemsize + (bqkv.size + bp.size) * 4
    cost = pl.CostEstimate(flops=flops,
                           transcendentals=B * NUM_HEADS * NUM_HEADS,
                           bytes_accessed=w_bytes + io_bytes)

    def weight_spec(shape):
        # Constant block index across the grid -> single-buffer (no double-buffer VMEM).
        return pl.BlockSpec(shape, lambda i: (0, 0), pipeline_mode=pl.Buffered(1))

    return pl.pallas_call(
        mha_kernel,
        out_shape=jax.ShapeDtypeStruct((B, C), x.dtype),
        grid=(B // block_b,),
        in_specs=[
            pl.BlockSpec((block_b, C), lambda i: (i, 0)),   # x (row-blocked, pipelined)
            weight_spec((C, 3 * C)),                        # wqkv (full, single-buffered)
            weight_spec((1, 3 * C)),                        # bqkv
            weight_spec((C, C)),                            # wp
            weight_spec((1, C)),                            # bp
        ],
        out_specs=pl.BlockSpec((block_b, C), lambda i: (i, 0)),
        compiler_params=pltpu.CompilerParams(
            dimension_semantics=("parallel",)),
        cost_estimate=cost,
    )(x, wqkv, bqkv, wp, bp)


def init_params(key, hidden):
    """Deterministic torch-Linear-style init; QKV weights fused to (C, 3C)."""
    keys = jax.random.split(key, 8)
    bound = 1.0 / math.sqrt(hidden)

    def linear(kw, kb):
        w = jax.random.uniform(kw, (hidden, hidden), jnp.float32, -bound, bound)  # (out,in)
        b = jax.random.uniform(kb, (hidden,), jnp.float32, -bound, bound)
        return w.T, b   # -> (in, out), (out,)

    wq, bq = linear(keys[0], keys[1])
    wk, bk = linear(keys[2], keys[3])
    wv, bv = linear(keys[4], keys[5])
    wp, bp = linear(keys[6], keys[7])

    wqkv = jnp.concatenate([wq, wk, wv], axis=1)          # (C, 3C)
    bqkv = jnp.concatenate([bq, bk, bv])[None, :]         # (1, 3C)
    return wqkv, bqkv, wp, bp[None, :]


def reference_forward(x, params):
    """Pure-JAX f32 reference matching the torch module (inference)."""
    wqkv, bqkv, wp, bp = params
    B, C = x.shape
    H = NUM_HEADS
    D = C // H
    qkv = x @ wqkv + bqkv
    q = qkv[:, 0 * C:1 * C].reshape(B, H, D)
    k = qkv[:, 1 * C:2 * C].reshape(B, H, D)
    v = qkv[:, 2 * C:3 * C].reshape(B, H, D)
    scores = jnp.einsum('bid,bjd->bij', q, k) / math.sqrt(D)
    attn = jax.nn.softmax(scores, axis=-1)
    out = jnp.einsum('bij,bjd->bid', attn, v).reshape(B, C)
    return out @ wp + bp


if __name__ == "__main__":
    B, HIDDEN = 8, 32
    key = jax.random.PRNGKey(0)
    kx, kp = jax.random.split(key)
    x = jax.random.normal(kx, (B, HIDDEN), dtype=jnp.float32)
    params = init_params(kp, HIDDEN)

    out = jax.block_until_ready(multi_head_attention(x, params))
    ref = reference_forward(x, params)

    assert out.shape == (B, HIDDEN)
    # Tolerance absorbs the bf16 cast of weights/activations feeding the two MXU
    # projections (accumulation is f32; softmax uses an exact divide).
    max_diff = float(jnp.max(jnp.abs(out - ref)))
    assert jnp.allclose(out, ref, atol=5e-2, rtol=5e-2), \
        f"mismatch vs JAX reference (max abs diff {max_diff})"
    print("KERNEL_OK")
</pallas_src>

<mosaic_0001>
module attributes {stable_mosaic.version = 11 : i64} {
  func.func @mha_kernel(%arg0: i32, %arg1: memref<8x32xf32, #tpu.memory_space<vmem>>, %arg2: memref<32x96xbf16, #tpu.memory_space<vmem>>, %arg3: memref<1x96xf32, #tpu.memory_space<vmem>>, %arg4: memref<32x32xbf16, #tpu.memory_space<vmem>>, %arg5: memref<1x32xf32, #tpu.memory_space<vmem>>, %arg6: memref<8x32xf32, #tpu.memory_space<vmem>>) attributes {dimension_semantics = [#tpu.dimension_semantics<parallel>], iteration_bounds = array<i64: 1>, scalar_prefetch = 0 : i64, scratch_operands = 0 : i64, tpu.core_type = #tpu.core_type<tc>, window_params = [{transform_indices = @transform_0, window_bounds = array<i64: 8, 32>}, {pipeline_mode = #tpu.pipeline_mode<synchronous>, transform_indices = @transform_1, window_bounds = array<i64: 32, 96>}, {pipeline_mode = #tpu.pipeline_mode<synchronous>, transform_indices = @transform_2, window_bounds = array<i64: 1, 96>}, {pipeline_mode = #tpu.pipeline_mode<synchronous>, transform_indices = @transform_3, window_bounds = array<i64: 32, 32>}, {pipeline_mode = #tpu.pipeline_mode<synchronous>, transform_indices = @transform_4, window_bounds = array<i64: 1, 32>}, {transform_indices = @transform_5, window_bounds = array<i64: 8, 32>}]} {
    %c0 = arith.constant 0 : index
    %c0_0 = arith.constant 0 : index
    %0 = vector.load %arg1[%c0, %c0_0] : memref<8x32xf32, #tpu.memory_space<vmem>>, vector<8x32xf32>
    %1 = arith.truncf %0 : vector<8x32xf32> to vector<8x32xbf16>
    %c0_1 = arith.constant 0 : index
    %c0_2 = arith.constant 0 : index
    %2 = vector.load %arg2[%c0_1, %c0_2] : memref<32x96xbf16, #tpu.memory_space<vmem>>, vector<32x96xbf16>
    %cst = arith.constant dense<0.000000e+00> : vector<8x96xf32>
    %3 = tpu.matmul %1, %2, %cst {dimension_numbers = #tpu.dot_dimension_numbers<[1], [0], [0], [1], [0, 0, 1, 1], [], []>} : vector<8x32xbf16>, vector<32x96xbf16>, vector<8x96xf32> -> vector<8x96xf32>
    %c0_3 = arith.constant 0 : index
    %c0_4 = arith.constant 0 : index
    %4 = vector.load %arg3[%c0_3, %c0_4] : memref<1x96xf32, #tpu.memory_space<vmem>>, vector<1x96xf32>
    %5 = vector.broadcast %4 : vector<1x96xf32> to vector<8x96xf32>
    %6 = arith.addf %3, %5 : vector<8x96xf32>
    %7 = vector.extract_strided_slice %6 {offsets = [0, 0], sizes = [8, 8], strides = [1, 1]} : vector<8x96xf32> to vector<8x8xf32>
    %8 = vector.extract_strided_slice %6 {offsets = [0, 8], sizes = [8, 8], strides = [1, 1]} : vector<8x96xf32> to vector<8x8xf32>
    %9 = vector.extract_strided_slice %6 {offsets = [0, 16], sizes = [8, 8], strides = [1, 1]} : vector<8x96xf32> to vector<8x8xf32>
    %10 = vector.extract_strided_slice %6 {offsets = [0, 24], sizes = [8, 8], strides = [1, 1]} : vector<8x96xf32> to vector<8x8xf32>
    %11 = vector.extract_strided_slice %6 {offsets = [0, 32], sizes = [8, 8], strides = [1, 1]} : vector<8x96xf32> to vector<8x8xf32>
    %12 = vector.extract_strided_slice %6 {offsets = [0, 40], sizes = [8, 8], strides = [1, 1]} : vector<8x96xf32> to vector<8x8xf32>
    %13 = vector.extract_strided_slice %6 {offsets = [0, 48], sizes = [8, 8], strides = [1, 1]} : vector<8x96xf32> to vector<8x8xf32>
    %14 = vector.extract_strided_slice %6 {offsets = [0, 56], sizes = [8, 8], strides = [1, 1]} : vector<8x96xf32> to vector<8x8xf32>
    %15 = vector.extract_strided_slice %6 {offsets = [0, 64], sizes = [8, 8], strides = [1, 1]} : vector<8x96xf32> to vector<8x8xf32>
    %16 = vector.extract_strided_slice %6 {offsets = [0, 72], sizes = [8, 8], strides = [1, 1]} : vector<8x96xf32> to vector<8x8xf32>
    %17 = vector.extract_strided_slice %6 {offsets = [0, 80], sizes = [8, 8], strides = [1, 1]} : vector<8x96xf32> to vector<8x8xf32>
    %18 = vector.extract_strided_slice %6 {offsets = [0, 88], sizes = [8, 8], strides = [1, 1]} : vector<8x96xf32> to vector<8x8xf32>
    %19 = arith.mulf %7, %11 : vector<8x8xf32>
    %cst_5 = arith.constant dense<0.000000e+00> : vector<8xf32>
    %20 = vector.multi_reduction <add>, %19, %cst_5 [1] : vector<8x8xf32> to vector<8xf32>
    %21 = vector.shape_cast %20 : vector<8xf32> to vector<8x1xf32>
    %cst_6 = arith.constant 0.353553385 : f32
    %22 = vector.broadcast %cst_6 : f32 to vector<8x1xf32>
    %23 = arith.mulf %21, %22 : vector<8x1xf32>
    %24 = arith.mulf %7, %12 : vector<8x8xf32>
    %cst_7 = arith.constant dense<0.000000e+00> : vector<8xf32>
    %25 = vector.multi_reduction <add>, %24, %cst_7 [1] : vector<8x8xf32> to vector<8xf32>
    %26 = vector.shape_cast %25 : vector<8xf32> to vector<8x1xf32>
    %cst_8 = arith.constant 0.353553385 : f32
    %27 = vector.broadcast %cst_8 : f32 to vector<8x1xf32>
    %28 = arith.mulf %26, %27 : vector<8x1xf32>
    %29 = arith.mulf %7, %13 : vector<8x8xf32>
    %cst_9 = arith.constant dense<0.000000e+00> : vector<8xf32>
    %30 = vector.multi_reduction <add>, %29, %cst_9 [1] : vector<8x8xf32> to vector<8xf32>
    %31 = vector.shape_cast %30 : vector<8xf32> to vector<8x1xf32>
    %cst_10 = arith.constant 0.353553385 : f32
    %32 = vector.broadcast %cst_10 : f32 to vector<8x1xf32>
    %33 = arith.mulf %31, %32 : vector<8x1xf32>
    %34 = arith.mulf %7, %14 : vector<8x8xf32>
    %cst_11 = arith.constant dense<0.000000e+00> : vector<8xf32>
    %35 = vector.multi_reduction <add>, %34, %cst_11 [1] : vector<8x8xf32> to vector<8xf32>
    %36 = vector.shape_cast %35 : vector<8xf32> to vector<8x1xf32>
    %cst_12 = arith.constant 0.353553385 : f32
    %37 = vector.broadcast %cst_12 : f32 to vector<8x1xf32>
    %38 = arith.mulf %36, %37 : vector<8x1xf32>
    %39 = arith.maximumf %23, %28 : vector<8x1xf32>
    %40 = arith.maximumf %39, %33 : vector<8x1xf32>
    %41 = arith.maximumf %40, %38 : vector<8x1xf32>
    %42 = arith.subf %23, %41 : vector<8x1xf32>
    %43 = math.exp %42 : vector<8x1xf32>
    %44 = arith.subf %28, %41 : vector<8x1xf32>
    %45 = math.exp %44 : vector<8x1xf32>
    %46 = arith.subf %33, %41 : vector<8x1xf32>
    %47 = math.exp %46 : vector<8x1xf32>
    %48 = arith.subf %38, %41 : vector<8x1xf32>
    %49 = math.exp %48 : vector<8x1xf32>
    %50 = arith.addf %43, %45 : vector<8x1xf32>
    %51 = arith.addf %50, %47 : vector<8x1xf32>
    %52 = arith.addf %51, %49 : vector<8x1xf32>
    %cst_13 = arith.constant 1.000000e+00 : f32
    %53 = vector.broadcast %cst_13 : f32 to vector<8x1xf32>
    %54 = arith.divf %53, %52 : vector<8x1xf32>
    %55 = arith.mulf %43, %54 : vector<8x1xf32>
    %56 = vector.broadcast %55 : vector<8x1xf32> to vector<8x8xf32>
    %57 = arith.mulf %56, %15 : vector<8x8xf32>
    %58 = arith.mulf %45, %54 : vector<8x1xf32>
    %59 = vector.broadcast %58 : vector<8x1xf32> to vector<8x8xf32>
    %60 = arith.mulf %59, %16 : vector<8x8xf32>
    %61 = arith.addf %57, %60 : vector<8x8xf32>
    %62 = arith.mulf %47, %54 : vector<8x1xf32>
    %63 = vector.broadcast %62 : vector<8x1xf32> to vector<8x8xf32>
    %64 = arith.mulf %63, %17 : vector<8x8xf32>
    %65 = arith.addf %61, %64 : vector<8x8xf32>
    %66 = arith.mulf %49, %54 : vector<8x1xf32>
    %67 = vector.broadcast %66 : vector<8x1xf32> to vector<8x8xf32>
    %68 = arith.mulf %67, %18 : vector<8x8xf32>
    %69 = arith.addf %65, %68 : vector<8x8xf32>
    %70 = arith.mulf %8, %11 : vector<8x8xf32>
    %cst_14 = arith.constant dense<0.000000e+00> : vector<8xf32>
    %71 = vector.multi_reduction <add>, %70, %cst_14 [1] : vector<8x8xf32> to vector<8xf32>
    %72 = vector.shape_cast %71 : vector<8xf32> to vector<8x1xf32>
    %cst_15 = arith.constant 0.353553385 : f32
    %73 = vector.broadcast %cst_15 : f32 to vector<8x1xf32>
    %74 = arith.mulf %72, %73 : vector<8x1xf32>
    %75 = arith.mulf %8, %12 : vector<8x8xf32>
    %cst_16 = arith.constant dense<0.000000e+00> : vector<8xf32>
    %76 = vector.multi_reduction <add>, %75, %cst_16 [1] : vector<8x8xf32> to vector<8xf32>
    %77 = vector.shape_cast %76 : vector<8xf32> to vector<8x1xf32>
    %cst_17 = arith.constant 0.353553385 : f32
    %78 = vector.broadcast %cst_17 : f32 to vector<8x1xf32>
    %79 = arith.mulf %77, %78 : vector<8x1xf32>
    %80 = arith.mulf %8, %13 : vector<8x8xf32>
    %cst_18 = arith.constant dense<0.000000e+00> : vector<8xf32>
    %81 = vector.multi_reduction <add>, %80, %cst_18 [1] : vector<8x8xf32> to vector<8xf32>
    %82 = vector.shape_cast %81 : vector<8xf32> to vector<8x1xf32>
    %cst_19 = arith.constant 0.353553385 : f32
    %83 = vector.broadcast %cst_19 : f32 to vector<8x1xf32>
    %84 = arith.mulf %82, %83 : vector<8x1xf32>
    %85 = arith.mulf %8, %14 : vector<8x8xf32>
    %cst_20 = arith.constant dense<0.000000e+00> : vector<8xf32>
    %86 = vector.multi_reduction <add>, %85, %cst_20 [1] : vector<8x8xf32> to vector<8xf32>
    %87 = vector.shape_cast %86 : vector<8xf32> to vector<8x1xf32>
    %cst_21 = arith.constant 0.353553385 : f32
    %88 = vector.broadcast %cst_21 : f32 to vector<8x1xf32>
    %89 = arith.mulf %87, %88 : vector<8x1xf32>
    %90 = arith.maximumf %74, %79 : vector<8x1xf32>
    %91 = arith.maximumf %90, %84 : vector<8x1xf32>
    %92 = arith.maximumf %91, %89 : vector<8x1xf32>
    %93 = arith.subf %74, %92 : vector<8x1xf32>
    %94 = math.exp %93 : vector<8x1xf32>
    %95 = arith.subf %79, %92 : vector<8x1xf32>
    %96 = math.exp %95 : vector<8x1xf32>
    %97 = arith.subf %84, %92 : vector<8x1xf32>
    %98 = math.exp %97 : vector<8x1xf32>
    %99 = arith.subf %89, %92 : vector<8x1xf32>
    %100 = math.exp %99 : vector<8x1xf32>
    %101 = arith.addf %94, %96 : vector<8x1xf32>
    %102 = arith.addf %101, %98 : vector<8x1xf32>
    %103 = arith.addf %102, %100 : vector<8x1xf32>
    %cst_22 = arith.constant 1.000000e+00 : f32
    %104 = vector.broadcast %cst_22 : f32 to vector<8x1xf32>
    %105 = arith.divf %104, %103 : vector<8x1xf32>
    %106 = arith.mulf %94, %105 : vector<8x1xf32>
    %107 = vector.broadcast %106 : vector<8x1xf32> to vector<8x8xf32>
    %108 = arith.mulf %107, %15 : vector<8x8xf32>
    %109 = arith.mulf %96, %105 : vector<8x1xf32>
    %110 = vector.broadcast %109 : vector<8x1xf32> to vector<8x8xf32>
    %111 = arith.mulf %110, %16 : vector<8x8xf32>
    %112 = arith.addf %108, %111 : vector<8x8xf32>
    %113 = arith.mulf %98, %105 : vector<8x1xf32>
    %114 = vector.broadcast %113 : vector<8x1xf32> to vector<8x8xf32>
    %115 = arith.mulf %114, %17 : vector<8x8xf32>
    %116 = arith.addf %112, %115 : vector<8x8xf32>
    %117 = arith.mulf %100, %105 : vector<8x1xf32>
    %118 = vector.broadcast %117 : vector<8x1xf32> to vector<8x8xf32>
    %119 = arith.mulf %118, %18 : vector<8x8xf32>
    %120 = arith.addf %116, %119 : vector<8x8xf32>
    %121 = arith.mulf %9, %11 : vector<8x8xf32>
    %cst_23 = arith.constant dense<0.000000e+00> : vector<8xf32>
    %122 = vector.multi_reduction <add>, %121, %cst_23 [1] : vector<8x8xf32> to vector<8xf32>
    %123 = vector.shape_cast %122 : vector<8xf32> to vector<8x1xf32>
    %cst_24 = arith.constant 0.353553385 : f32
    %124 = vector.broadcast %cst_24 : f32 to vector<8x1xf32>
    %125 = arith.mulf %123, %124 : vector<8x1xf32>
    %126 = arith.mulf %9, %12 : vector<8x8xf32>
    %cst_25 = arith.constant dense<0.000000e+00> : vector<8xf32>
    %127 = vector.multi_reduction <add>, %126, %cst_25 [1] : vector<8x8xf32> to vector<8xf32>
    %128 = vector.shape_cast %127 : vector<8xf32> to vector<8x1xf32>
    %cst_26 = arith.constant 0.353553385 : f32
    %129 = vector.broadcast %cst_26 : f32 to vector<8x1xf32>
    %130 = arith.mulf %128, %129 : vector<8x1xf32>
    %131 = arith.mulf %9, %13 : vector<8x8xf32>
    %cst_27 = arith.constant dense<0.000000e+00> : vector<8xf32>
    %132 = vector.multi_reduction <add>, %131, %cst_27 [1] : vector<8x8xf32> to vector<8xf32>
    %133 = vector.shape_cast %132 : vector<8xf32> to vector<8x1xf32>
    %cst_28 = arith.constant 0.353553385 : f32
    %134 = vector.broadcast %cst_28 : f32 to vector<8x1xf32>
    %135 = arith.mulf %133, %134 : vector<8x1xf32>
    %136 = arith.mulf %9, %14 : vector<8x8xf32>
    %cst_29 = arith.constant dense<0.000000e+00> : vector<8xf32>
    %137 = vector.multi_reduction <add>, %136, %cst_29 [1] : vector<8x8xf32> to vector<8xf32>
    %138 = vector.shape_cast %137 : vector<8xf32> to vector<8x1xf32>
    %cst_30 = arith.constant 0.353553385 : f32
    %139 = vector.broadcast %cst_30 : f32 to vector<8x1xf32>
    %140 = arith.mulf %138, %139 : vector<8x1xf32>
    %141 = arith.maximumf %125, %130 : vector<8x1xf32>
    %142 = arith.maximumf %141, %135 : vector<8x1xf32>
    %143 = arith.maximumf %142, %140 : vector<8x1xf32>
    %144 = arith.subf %125, %143 : vector<8x1xf32>
    %145 = math.exp %144 : vector<8x1xf32>
    %146 = arith.subf %130, %143 : vector<8x1xf32>
    %147 = math.exp %146 : vector<8x1xf32>
    %148 = arith.subf %135, %143 : vector<8x1xf32>
    %149 = math.exp %148 : vector<8x1xf32>
    %150 = arith.subf %140, %143 : vector<8x1xf32>
    %151 = math.exp %150 : vector<8x1xf32>
    %152 = arith.addf %145, %147 : vector<8x1xf32>
    %153 = arith.addf %152, %149 : vector<8x1xf32>
    %154 = arith.addf %153, %151 : vector<8x1xf32>
    %cst_31 = arith.constant 1.000000e+00 : f32
    %155 = vector.broadcast %cst_31 : f32 to vector<8x1xf32>
    %156 = arith.divf %155, %154 : vector<8x1xf32>
    %157 = arith.mulf %145, %156 : vector<8x1xf32>
    %158 = vector.broadcast %157 : vector<8x1xf32> to vector<8x8xf32>
    %159 = arith.mulf %158, %15 : vector<8x8xf32>
    %160 = arith.mulf %147, %156 : vector<8x1xf32>
    %161 = vector.broadcast %160 : vector<8x1xf32> to vector<8x8xf32>
    %162 = arith.mulf %161, %16 : vector<8x8xf32>
    %163 = arith.addf %159, %162 : vector<8x8xf32>
    %164 = arith.mulf %149, %156 : vector<8x1xf32>
    %165 = vector.broadcast %164 : vector<8x1xf32> to vector<8x8xf32>
    %166 = arith.mulf %165, %17 : vector<8x8xf32>
    %167 = arith.addf %163, %166 : vector<8x8xf32>
    %168 = arith.mulf %151, %156 : vector<8x1xf32>
    %169 = vector.broadcast %168 : vector<8x1xf32> to vector<8x8xf32>
    %170 = arith.mulf %169, %18 : vector<8x8xf32>
    %171 = arith.addf %167, %170 : vector<8x8xf32>
    %172 = arith.mulf %10, %11 : vector<8x8xf32>
    %cst_32 = arith.constant dense<0.000000e+00> : vector<8xf32>
    %173 = vector.multi_reduction <add>, %172, %cst_32 [1] : vector<8x8xf32> to vector<8xf32>
    %174 = vector.shape_cast %173 : vector<8xf32> to vector<8x1xf32>
    %cst_33 = arith.constant 0.353553385 : f32
    %175 = vector.broadcast %cst_33 : f32 to vector<8x1xf32>
    %176 = arith.mulf %174, %175 : vector<8x1xf32>
    %177 = arith.mulf %10, %12 : vector<8x8xf32>
    %cst_34 = arith.constant dense<0.000000e+00> : vector<8xf32>
    %178 = vector.multi_reduction <add>, %177, %cst_34 [1] : vector<8x8xf32> to vector<8xf32>
    %179 = vector.shape_cast %178 : vector<8xf32> to vector<8x1xf32>
    %cst_35 = arith.constant 0.353553385 : f32
    %180 = vector.broadcast %cst_35 : f32 to vector<8x1xf32>
    %181 = arith.mulf %179, %180 : vector<8x1xf32>
    %182 = arith.mulf %10, %13 : vector<8x8xf32>
    %cst_36 = arith.constant dense<0.000000e+00> : vector<8xf32>
    %183 = vector.multi_reduction <add>, %182, %cst_36 [1] : vector<8x8xf32> to vector<8xf32>
    %184 = vector.shape_cast %183 : vector<8xf32> to vector<8x1xf32>
    %cst_37 = arith.constant 0.353553385 : f32
    %185 = vector.broadcast %cst_37 : f32 to vector<8x1xf32>
    %186 = arith.mulf %184, %185 : vector<8x1xf32>
    %187 = arith.mulf %10, %14 : vector<8x8xf32>
    %cst_38 = arith.constant dense<0.000000e+00> : vector<8xf32>
    %188 = vector.multi_reduction <add>, %187, %cst_38 [1] : vector<8x8xf32> to vector<8xf32>
    %189 = vector.shape_cast %188 : vector<8xf32> to vector<8x1xf32>
    %cst_39 = arith.constant 0.353553385 : f32
    %190 = vector.broadcast %cst_39 : f32 to vector<8x1xf32>
    %191 = arith.mulf %189, %190 : vector<8x1xf32>
    %192 = arith.maximumf %176, %181 : vector<8x1xf32>
    %193 = arith.maximumf %192, %186 : vector<8x1xf32>
    %194 = arith.maximumf %193, %191 : vector<8x1xf32>
    %195 = arith.subf %176, %194 : vector<8x1xf32>
    %196 = math.exp %195 : vector<8x1xf32>
    %197 = arith.subf %181, %194 : vector<8x1xf32>
    %198 = math.exp %197 : vector<8x1xf32>
    %199 = arith.subf %186, %194 : vector<8x1xf32>
    %200 = math.exp %199 : vector<8x1xf32>
    %201 = arith.subf %191, %194 : vector<8x1xf32>
    %202 = math.exp %201 : vector<8x1xf32>
    %203 = arith.addf %196, %198 : vector<8x1xf32>
    %204 = arith.addf %203, %200 : vector<8x1xf32>
    %205 = arith.addf %204, %202 : vector<8x1xf32>
    %cst_40 = arith.constant 1.000000e+00 : f32
    %206 = vector.broadcast %cst_40 : f32 to vector<8x1xf32>
    %207 = arith.divf %206, %205 : vector<8x1xf32>
    %208 = arith.mulf %196, %207 : vector<8x1xf32>
    %209 = vector.broadcast %208 : vector<8x1xf32> to vector<8x8xf32>
    %210 = arith.mulf %209, %15 : vector<8x8xf32>
    %211 = arith.mulf %198, %207 : vector<8x1xf32>
    %212 = vector.broadcast %211 : vector<8x1xf32> to vector<8x8xf32>
    %213 = arith.mulf %212, %16 : vector<8x8xf32>
    %214 = arith.addf %210, %213 : vector<8x8xf32>
    %215 = arith.mulf %200, %207 : vector<8x1xf32>
    %216 = vector.broadcast %215 : vector<8x1xf32> to vector<8x8xf32>
    %217 = arith.mulf %216, %17 : vector<8x8xf32>
    %218 = arith.addf %214, %217 : vector<8x8xf32>
    %219 = arith.mulf %202, %207 : vector<8x1xf32>
    %220 = vector.broadcast %219 : vector<8x1xf32> to vector<8x8xf32>
    %221 = arith.mulf %220, %18 : vector<8x8xf32>
    %222 = arith.addf %218, %221 : vector<8x8xf32>
    %223 = tpu.concatenate %69, %120, %171, %222 in 1 : vector<8x8xf32>, vector<8x8xf32>, vector<8x8xf32>, vector<8x8xf32> -> vector<8x32xf32>
    %224 = arith.truncf %223 : vector<8x32xf32> to vector<8x32xbf16>
    %c0_41 = arith.constant 0 : index
    %c0_42 = arith.constant 0 : index
    %225 = vector.load %arg4[%c0_41, %c0_42] : memref<32x32xbf16, #tpu.memory_space<vmem>>, vector<32x32xbf16>
    %cst_43 = arith.constant dense<0.000000e+00> : vector<8x32xf32>
    %226 = tpu.matmul %224, %225, %cst_43 {dimension_numbers = #tpu.dot_dimension_numbers<[1], [0], [0], [1], [0, 0, 1, 1], [], []>} : vector<8x32xbf16>, vector<32x32xbf16>, vector<8x32xf32> -> vector<8x32xf32>
    %c0_44 = arith.constant 0 : index
    %c0_45 = arith.constant 0 : index
    %227 = vector.load %arg5[%c0_44, %c0_45] : memref<1x32xf32, #tpu.memory_space<vmem>>, vector<1x32xf32>
    %228 = vector.broadcast %227 : vector<1x32xf32> to vector<8x32xf32>
    %229 = arith.addf %226, %228 : vector<8x32xf32>
    %c0_46 = arith.constant 0 : index
    %c0_47 = arith.constant 0 : index
    %230 = vector.load %arg6[%c0_46, %c0_47] : memref<8x32xf32, #tpu.memory_space<vmem>>, vector<8x32xf32>
    tpu.vector_store %arg6[%c0_46, %c0_47], %229 {strides = array<i32>} : memref<8x32xf32, #tpu.memory_space<vmem>>, vector<8x32xf32>,
    return
  }
  func.func @transform_0(%arg0: i32) -> (i32, i32) {
    %c0_i32 = arith.constant 0 : i32
    %c0_i32_0 = arith.constant 0 : i32
    return %arg0, %c0_i32 : i32, i32
  }
  func.func @transform_1(%arg0: i32) -> (i32, i32) {
    %c0_i32 = arith.constant 0 : i32
    %c0_i32_0 = arith.constant 0 : i32
    %c0_i32_1 = arith.constant 0 : i32
    return %c0_i32, %c0_i32_0 : i32, i32
  }
  func.func @transform_2(%arg0: i32) -> (i32, i32) {
    %c0_i32 = arith.constant 0 : i32
    %c0_i32_0 = arith.constant 0 : i32
    %c0_i32_1 = arith.constant 0 : i32
    return %c0_i32, %c0_i32_0 : i32, i32
  }
  func.func @transform_3(%arg0: i32) -> (i32, i32) {
    %c0_i32 = arith.constant 0 : i32
    %c0_i32_0 = arith.constant 0 : i32
    %c0_i32_1 = arith.constant 0 : i32
    return %c0_i32, %c0_i32_0 : i32, i32
  }
  func.func @transform_4(%arg0: i32) -> (i32, i32) {
    %c0_i32 = arith.constant 0 : i32
    %c0_i32_0 = arith.constant 0 : i32
    %c0_i32_1 = arith.constant 0 : i32
    return %c0_i32, %c0_i32_0 : i32, i32
  }
  func.func @transform_5(%arg0: i32) -> (i32, i32) {
    %c0_i32 = arith.constant 0 : i32
    %c0_i32_0 = arith.constant 0 : i32
    return %arg0, %c0_i32 : i32, i32
  }
}

</mosaic_0001>

<llo_original>
// kernel: tpu_custom_call.1
$region0: #{tpu_custom_call.1}
  #allocation0 [shape = 'u32[]', space=smem, size = 0x4, offset = 0x4, fixed_abs, tag = 'smem constant byte address 0x4 - core index']
  #allocation1 [shape = 'u32[144,128]{1,0:T(1,128)}', space=vmem, size = 0x12000, scoped, tag = 'internal scratch']
  %s0 = inlined_call_operand.hbm [shape: f32[8,32], index: 0, kind: input, shape index: {}]
  %s1 = inlined_call_operand.hbm [shape: bf16[32,96], index: 1, kind: input, shape index: {}]
  %s2 = inlined_call_operand.vmem [shape: f32[1,96], index: 2, kind: input, shape index: {}]
  %s3 = inlined_call_operand.hbm [shape: bf16[32,32], index: 3, kind: input, shape index: {}]
  %s4 = inlined_call_operand.vmem [shape: f32[1,32], index: 4, kind: input, shape index: {}]
  %s5 = inlined_call_operand.hbm [shape: f32[8,32], index: 5, kind: output, shape index: {}]
  %s6 = sld [smem:[#allocation0]]
  $region42: #{tpu_custom_call.1} parent=0
    _
  %s8 = ssub.s32 1, %s6
  %s9 = scalar_select 0, %s8, %s6
  $region1: #{tpu_custom_call.1} parent=0
    #allocation2 [shape = 'u8[4096]{0}', space=vmem, size = 0x1000, scoped, tag = 'input window, operand 0, single buffered']
    #allocation3 [shape = 's32[1]{0}', space=sflag, size = 0x4, scoped, tag = 'scoped memory for tpu_custom_call.1']
    #allocation4 [shape = 's32[1]{0}', space=sflag, size = 0x4, scoped, tag = 'scoped memory for tpu_custom_call.1']
    #allocation5 [shape = 'u8[8192]{0}', space=vmem, size = 0x2000, scoped, tag = 'input window, operand 1, single buffered']
    #allocation6 [shape = 's32[1]{0}', space=sflag, size = 0x4, scoped, tag = 'scoped memory for tpu_custom_call.1']
    #allocation7 [shape = 'u8[8192]{0}', space=vmem, size = 0x2000, scoped, tag = 'input window, operand 3, single buffered']
    #allocation8 [shape = 'u8[4096]{0}', space=vmem, size = 0x1000, scoped, tag = 'output window, operand 0, single buffered']
    %10 = vsyncpa [#allocation3], 0
    %11 = vsyncpa [#allocation6], 0
    %12 = vsyncpa [#allocation4], 0
    // Predicated region
    $region2: #{tpu_custom_call.1} parent=1 // pred_check
      _
    $region3: #{tpu_custom_call.1} parent=1 // pred_check_branch
      %14 = sbr.rel (0) target = $region5
    $region4: #{tpu_custom_call.1} parent=1 // pred_region
      %s16 = ssub.s32 128, 128
      %17 = vsyncadd [#allocation3], %s16
      %s19 = sshll.u32 [#allocation2], 4
      %s20 = int_to_ptr.vmem [resolvable:$true] %s19
      %22 = dma.hbm_to_vmem [thread:$0]  %s0, 128, %s20, [#allocation3]
    $region5: #{tpu_custom_call.1} parent=1 // pred_fallthru
      _
    // Predicated region
    $region6: #{tpu_custom_call.1} parent=1 // pred_check
      _
    $region7: #{tpu_custom_call.1} parent=1 // pred_check_branch
      %24 = sbr.rel (0) target = $region9
    $region8: #{tpu_custom_call.1} parent=1 // pred_region
      %s26 = ssub.s32 256, 256
      %27 = vsyncadd [#allocation6], %s26
      %s28 = sshll.u32 [#allocation5], 4
      %s29 = int_to_ptr.vmem [resolvable:$true] %s28
      %34 = dma.hbm_to_vmem [thread:$0]  %s1, 256, %s29, [#allocation6], 64, 64, 4
    $region9: #{tpu_custom_call.1} parent=1 // pred_fallthru
      _
    // Predicated region
    $region10: #{tpu_custom_call.1} parent=1 // pred_check
      _
    $region11: #{tpu_custom_call.1} parent=1 // pred_check_branch
      %36 = sbr.rel (0) target = $region13
    $region12: #{tpu_custom_call.1} parent=1 // pred_region
      _
    $region13: #{tpu_custom_call.1} parent=1 // pred_fallthru
      _
    // Predicated region
    $region14: #{tpu_custom_call.1} parent=1 // pred_check
      _
    $region15: #{tpu_custom_call.1} parent=1 // pred_check_branch
      %38 = sbr.rel (0) target = $region17
    $region16: #{tpu_custom_call.1} parent=1 // pred_region
      %s40 = ssub.s32 256, 256
      %41 = vsyncadd [#allocation6], %s40
      %s42 = sshll.u32 [#allocation7], 4
      %s43 = int_to_ptr.vmem [resolvable:$true] %s42
      %48 = dma.hbm_to_vmem [thread:$0]  %s3, 256, %s43, [#allocation6], 64, 64, 4
    $region17: #{tpu_custom_call.1} parent=1 // pred_fallthru
      _
    // Predicated region
    $region18: #{tpu_custom_call.1} parent=1 // pred_check
      _
    $region19: #{tpu_custom_call.1} parent=1 // pred_check_branch
      %50 = sbr.rel (0) target = $region21
    $region20: #{tpu_custom_call.1} parent=1 // pred_region
      _
    $region21: #{tpu_custom_call.1} parent=1 // pred_fallthru
      _
    // Predicated region
    $region22: #{tpu_custom_call.1} parent=1 // pred_check
      _
    $region23: #{tpu_custom_call.1} parent=1 // pred_check_branch
      %52 = sbr.rel (0) target = $region25
    $region24: #{tpu_custom_call.1} parent=1 // pred_region
      %53 = dma.done [#allocation3], 128
    $region25: #{tpu_custom_call.1} parent=1 // pred_fallthru
      _
    // Predicated region
    $region26: #{tpu_custom_call.1} parent=1 // pred_check
      _
    $region27: #{tpu_custom_call.1} parent=1 // pred_check_branch
      %55 = sbr.rel (0) target = $region29
    $region28: #{tpu_custom_call.1} parent=1 // pred_region
      %56 = dma.done [#allocation6], 256
    $region29: #{tpu_custom_call.1} parent=1 // pred_fallthru
      _
    // Predicated region
    $region30: #{tpu_custom_call.1} parent=1 // pred_check
      _
    $region31: #{tpu_custom_call.1} parent=1 // pred_check_branch
      %58 = sbr.rel (0) target = $region33
    $region32: #{tpu_custom_call.1} parent=1 // pred_region
      %59 = dma.done [#allocation6], 256
    $region33: #{tpu_custom_call.1} parent=1 // pred_fallthru
      _
    %v61 = vld [vmem:[#allocation2] sm:$0xff]
    %v62 = vpack.c.bf16 %v61, %v61
    %v63 = vld [vmem:[#allocation5] sm:$0xf]
    %v64 = vld [vmem:[#allocation5 + $0x4] sm:$0xf]
    %v65 = vld [vmem:[#allocation5 + $0x8] sm:$0xf]
    %v66 = vld [vmem:[#allocation5 + $0xc] sm:$0xf]
    %v67 = vld [vmem:[%s2] sm:$0x1]
    %v69 = vlaneseq
    %v70 = vshrl.u32 %v69, 7
    %v71 = vsub.s32 0, %v70
    %v72 = vrot.slane %v67, %v71
    %v78 = vunpack.c.l.b16 %v63
    %v79 = vunpack.c.l.b16 %v64
    %v80 = vunpack.c.l.b16 %v65
    %v81 = vunpack.c.l.b16 %v66
    %v82 = vpack.c.b16 %v79, %v78
    %v83 = vpack.c.b16 %v81, %v80
    %vm86 = vcmask 261120
    %v88 = vsel %vm86, %v62, 0
    %90 = vmatprep.subr.bf16.mxu0 0
    %91 = vmatpush1.bf16.msra.mxu0 %v82
    %92 = vmatprep.subr.bf16.mxu0 0
    %93 = vmatpush1.bf16.msra.mxu0 %v83
    %94 = vmatprep.subr.bf16.mxu0 0
    %95 = vmatpush1.bf16.msra.mxu0 0
    %96 = vmatprep.subr.bf16.mxu0 0
    %97 = vmatpush1.bf16.msra.mxu0 0
    %98 = vmatprep.subr.bf16.mxu0 0
    %99 = vmatpush1.bf16.msra.mxu0 0
    %100 = vmatprep.subr.bf16.mxu0 0
    %101 = vmatpush1.bf16.msra.mxu0 0
    %102 = vmatprep.subr.bf16.mxu0 0
    %103 = vmatpush1.bf16.msra.mxu0 0
    %104 = vmatprep.subr.bf16.mxu0 0
    %105 = vmatpush1.bf16.msra.mxu0 0
    %106 = vmatprep.subr.bf16.mxu0 0
    %107 = vmatpush1.bf16.msra.mxu0 0
    %108 = vmatprep.subr.bf16.mxu0 0
    %109 = vmatpush1.bf16.msra.mxu0 0
    %110 = vmatprep.subr.bf16.mxu0 0
    %111 = vmatpush1.bf16.msra.mxu0 0
    %112 = vmatprep.subr.bf16.mxu0 0
    %113 = vmatpush1.bf16.msra.mxu0 0
    %114 = vmatprep.subr.bf16.mxu0 0
    %115 = vmatpush1.bf16.msra.mxu0 0
    %116 = vmatprep.subr.bf16.mxu0 0
    %117 = vmatpush1.bf16.msra.mxu0 0
    %118 = vmatprep.subr.bf16.mxu0 0
    %119 = vmatpush1.bf16.msra.mxu0 0
    %120 = vmatprep.subr.bf16.mxu0 0
    %121 = vmatpush1.bf16.msra.mxu0 0
    %122 = vmatprep.mubr.bf16.mxu0 0
    %123 = vmatmul.mubr.bf16.gmra.mrb[0].mxu0 %v88
    %v124 = vpop.f32.mrb[0].mxu0
    %v125 = vadd.f32 %v72, %v124
    %v126 = vpop.f32.mrb[0].mxu0
    %v127 = vpop.f32.mrb[0].mxu0
    %v128 = vpop.f32.mrb[0].mxu0
    %129 = vdwg.mxu0
    %131 = vrot.lane.b32.xlu0 %v125, 96
    %v132 = vpop.permute.xlu0 %131
    %v134 = vmul.f32 %v125, %v132
    %vm135 = vcmask 64512
    %v136 = vsel %vm135, %v134, 0.0
    %137 = vadd.xlane.f32.xlu0 %v136
    %v138 = vpop.xlane.xlu0 %137
    %v139 = vmul.f32 %v138, 0.35355338
    %140 = vrot.lane.b32.xlu0 %v125, 88
    %v141 = vpop.permute.xlu0 %140
    %v143 = vmul.f32 %v125, %v141
    %v144 = vsel %vm135, %v143, 0.0
    %145 = vadd.xlane.f32.xlu0 %v144
    %v146 = vpop.xlane.xlu0 %145
    %v147 = vmul.f32 %v146, 0.35355338
    %148 = vrot.lane.b32.xlu0 %v125, 80
    %v149 = vpop.permute.xlu0 %148
    %v151 = vmul.f32 %v125, %v149
    %v152 = vsel %vm135, %v151, 0.0
    %153 = vadd.xlane.f32.xlu0 %v152
    %v154 = vpop.xlane.xlu0 %153
    %v155 = vmul.f32 %v154, 0.35355338
    %156 = vrot.lane.b32.xlu0 %v125, 72
    %v157 = vpop.permute.xlu0 %156
    %v159 = vmul.f32 %v125, %v157
    %v160 = vsel %vm135, %v159, 0.0
    %161 = vadd.xlane.f32.xlu0 %v160
    %v162 = vpop.xlane.xlu0 %161
    %v163 = vmul.f32 %v162, 0.35355338
    %v164 = vmax.f32 %v139, %v147
    %v165 = vmax.f32 %v164, %v155
    %v166 = vmax.f32 %v165, %v163
    %v167 = vsub.f32 %v139, %v166
    %v168 = vmul.f32 %v167, 1.442695
    %v169 = vpow.pop %v168
    %v170 = vsub.f32 %v147, %v166
    %v171 = vmul.f32 %v170, 1.442695
    %v172 = vpow.pop %v171
    %v173 = vsub.f32 %v155, %v166
    %v174 = vmul.f32 %v173, 1.442695
    %v175 = vpow.pop %v174
    %v176 = vsub.f32 %v163, %v166
    %v177 = vmul.f32 %v176, 1.442695
    %v178 = vpow.pop %v177
    %v179 = vadd.f32 %v169, %v172
    %v180 = vadd.f32 %v179, %v175
    %v181 = vadd.f32 %v180, %v178
    %v182 = vrcp.pop %v181
    %v183 = vmul.f32 1.0, %v182
    %v184 = vmul.f32 %v169, %v183
    %v185 = vmul.f32 %v184, %v125
    %v186 = vmul.f32 %v172, %v183
    %v187 = vmul.f32 %v186, %v125
    %189 = vrot.lane.b32.xlu0 %v187, 120
    %v190 = vpop.permute.xlu0 %189
    %v192 = vadd.f32 %v185, %v190
    %v193 = vmul.f32 %v175, %v183
    %v194 = vmul.f32 %v193, %v125
    %196 = vrot.lane.b32.xlu0 %v194, 112
    %v197 = vpop.permute.xlu0 %196
    %v199 = vadd.f32 %v192, %v197
    %v200 = vmul.f32 %v178, %v183
    %v201 = vmul.f32 %v200, %v125
    %203 = vrot.lane.b32.xlu0 %v201, 104
    %v204 = vpop.permute.xlu0 %203
    %v206 = vadd.f32 %v199, %v204
    %207 = vrot.lane.b32.xlu0 %v125, 104
    %v208 = vpop.permute.xlu0 %207
    %v210 = vmul.f32 %v125, %v208
    %212 = vrot.lane.b32.xlu0 %v210, 120
    %v213 = vpop.permute.xlu0 %212
    %v215 = vsel %vm135, %v213, 0.0
    %216 = vadd.xlane.f32.xlu0 %v215
    %v217 = vpop.xlane.xlu0 %216
    %v218 = vmul.f32 %v217, 0.35355338
    %220 = vrot.lane.b32.xlu0 %v134, 120
    %v221 = vpop.permute.xlu0 %220
    %v223 = vsel %vm135, %v221, 0.0
    %224 = vadd.xlane.f32.xlu0 %v223
    %v225 = vpop.xlane.xlu0 %224
    %v226 = vmul.f32 %v225, 0.35355338
    %228 = vrot.lane.b32.xlu0 %v143, 120
    %v229 = vpop.permute.xlu0 %228
    %v231 = vsel %vm135, %v229, 0.0
    %232 = vadd.xlane.f32.xlu0 %v231
    %v233 = vpop.xlane.xlu0 %232
    %v234 = vmul.f32 %v233, 0.35355338
    %236 = vrot.lane.b32.xlu0 %v151, 120
    %v237 = vpop.permute.xlu0 %236
    %v239 = vsel %vm135, %v237, 0.0
    %240 = vadd.xlane.f32.xlu0 %v239
    %v241 = vpop.xlane.xlu0 %240
    %v242 = vmul.f32 %v241, 0.35355338
    %v243 = vmax.f32 %v218, %v226
    %v244 = vmax.f32 %v243, %v234
    %v245 = vmax.f32 %v244, %v242
    %v246 = vsub.f32 %v218, %v245
    %v247 = vmul.f32 %v246, 1.442695
    %v248 = vpow.pop %v247
    %v249 = vsub.f32 %v226, %v245
    %v250 = vmul.f32 %v249, 1.442695
    %v251 = vpow.pop %v250
    %v252 = vsub.f32 %v234, %v245
    %v253 = vmul.f32 %v252, 1.442695
    %v254 = vpow.pop %v253
    %v255 = vsub.f32 %v242, %v245
    %v256 = vmul.f32 %v255, 1.442695
    %v257 = vpow.pop %v256
    %v258 = vadd.f32 %v248, %v251
    %v259 = vadd.f32 %v258, %v254
    %v260 = vadd.f32 %v259, %v257
    %v261 = vrcp.pop %v260
    %v262 = vmul.f32 1.0, %v261
    %v263 = vmul.f32 %v248, %v262
    %v264 = vmul.f32 %v263, %v125
    %v265 = vmul.f32 %v251, %v262
    %v266 = vmul.f32 %v265, %v125
    %268 = vrot.lane.b32.xlu0 %v266, 120
    %v269 = vpop.permute.xlu0 %268
    %v271 = vadd.f32 %v264, %v269
    %v272 = vmul.f32 %v254, %v262
    %v273 = vmul.f32 %v272, %v125
    %275 = vrot.lane.b32.xlu0 %v273, 112
    %v276 = vpop.permute.xlu0 %275
    %v278 = vadd.f32 %v271, %v276
    %v279 = vmul.f32 %v257, %v262
    %v280 = vmul.f32 %v279, %v125
    %282 = vrot.lane.b32.xlu0 %v280, 104
    %v283 = vpop.permute.xlu0 %282
    %v285 = vadd.f32 %v278, %v283
    %286 = vrot.lane.b32.xlu0 %v125, 112
    %v287 = vpop.permute.xlu0 %286
    %v289 = vmul.f32 %v125, %v287
    %291 = vrot.lane.b32.xlu0 %v289, 112
    %v292 = vpop.permute.xlu0 %291
    %v294 = vsel %vm135, %v292, 0.0
    %295 = vadd.xlane.f32.xlu0 %v294
    %v296 = vpop.xlane.xlu0 %295
    %v297 = vmul.f32 %v296, 0.35355338
    %298 = vrot.lane.b32.xlu0 %v210, 112
    %v299 = vpop.permute.xlu0 %298
    %v301 = vsel %vm135, %v299, 0.0
    %302 = vadd.xlane.f32.xlu0 %v301
    %v303 = vpop.xlane.xlu0 %302
    %v304 = vmul.f32 %v303, 0.35355338
    %305 = vrot.lane.b32.xlu0 %v134, 112
    %v306 = vpop.permute.xlu0 %305
    %v308 = vsel %vm135, %v306, 0.0
    %309 = vadd.xlane.f32.xlu0 %v308
    %v310 = vpop.xlane.xlu0 %309
    %v311 = vmul.f32 %v310, 0.35355338
    %312 = vrot.lane.b32.xlu0 %v143, 112
    %v313 = vpop.permute.xlu0 %312
    %v315 = vsel %vm135, %v313, 0.0
    %316 = vadd.xlane.f32.xlu0 %v315
    %v317 = vpop.xlane.xlu0 %316
    %v318 = vmul.f32 %v317, 0.35355338
    %v319 = vmax.f32 %v297, %v304
    %v320 = vmax.f32 %v319, %v311
    %v321 = vmax.f32 %v320, %v318
    %v322 = vsub.f32 %v297, %v321
    %v323 = vmul.f32 %v322, 1.442695
    %v324 = vpow.pop %v323
    %v325 = vsub.f32 %v304, %v321
    %v326 = vmul.f32 %v325, 1.442695
    %v327 = vpow.pop %v326
    %v328 = vsub.f32 %v311, %v321
    %v329 = vmul.f32 %v328, 1.442695
    %v330 = vpow.pop %v329
    %v331 = vsub.f32 %v318, %v321
    %v332 = vmul.f32 %v331, 1.442695
    %v333 = vpow.pop %v332
    %v334 = vadd.f32 %v324, %v327
    %v335 = vadd.f32 %v334, %v330
    %v336 = vadd.f32 %v335, %v333
    %v337 = vrcp.pop %v336
    %v338 = vmul.f32 1.0, %v337
    %v339 = vmul.f32 %v324, %v338
    %v340 = vmul.f32 %v339, %v125
    %v341 = vmul.f32 %v327, %v338
    %v342 = vmul.f32 %v341, %v125
    %344 = vrot.lane.b32.xlu0 %v342, 120
    %v345 = vpop.permute.xlu0 %344
    %v347 = vadd.f32 %v340, %v345
    %v348 = vmul.f32 %v330, %v338
    %v349 = vmul.f32 %v348, %v125
    %351 = vrot.lane.b32.xlu0 %v349, 112
    %v352 = vpop.permute.xlu0 %351
    %v354 = vadd.f32 %v347, %v352
    %v355 = vmul.f32 %v333, %v338
    %v356 = vmul.f32 %v355, %v125
    %358 = vrot.lane.b32.xlu0 %v356, 104
    %v359 = vpop.permute.xlu0 %358
    %v361 = vadd.f32 %v354, %v359
    %362 = vrot.lane.b32.xlu0 %v125, 120
    %v363 = vpop.permute.xlu0 %362
    %v365 = vmul.f32 %v125, %v363
    %367 = vrot.lane.b32.xlu0 %v365, 104
    %v368 = vpop.permute.xlu0 %367
    %v370 = vsel %vm135, %v368, 0.0
    %371 = vadd.xlane.f32.xlu0 %v370
    %v372 = vpop.xlane.xlu0 %371
    %v373 = vmul.f32 %v372, 0.35355338
    %374 = vrot.lane.b32.xlu0 %v289, 104
    %v375 = vpop.permute.xlu0 %374
    %v377 = vsel %vm135, %v375, 0.0
    %378 = vadd.xlane.f32.xlu0 %v377
    %v379 = vpop.xlane.xlu0 %378
    %v380 = vmul.f32 %v379, 0.35355338
    %381 = vrot.lane.b32.xlu0 %v210, 104
    %v382 = vpop.permute.xlu0 %381
    %v384 = vsel %vm135, %v382, 0.0
    %385 = vadd.xlane.f32.xlu0 %v384
    %v386 = vpop.xlane.xlu0 %385
    %v387 = vmul.f32 %v386, 0.35355338
    %388 = vrot.lane.b32.xlu0 %v134, 104
    %v389 = vpop.permute.xlu0 %388
    %v391 = vsel %vm135, %v389, 0.0
    %392 = vadd.xlane.f32.xlu0 %v391
    %v393 = vpop.xlane.xlu0 %392
    %v394 = vmul.f32 %v393, 0.35355338
    %v395 = vmax.f32 %v373, %v380
    %v396 = vmax.f32 %v395, %v387
    %v397 = vmax.f32 %v396, %v394
    %v398 = vsub.f32 %v373, %v397
    %v399 = vmul.f32 %v398, 1.442695
    %v400 = vpow.pop %v399
    %v401 = vsub.f32 %v380, %v397
    %v402 = vmul.f32 %v401, 1.442695
    %v403 = vpow.pop %v402
    %v404 = vsub.f32 %v387, %v397
    %v405 = vmul.f32 %v404, 1.442695
    %v406 = vpow.pop %v405
    %v407 = vsub.f32 %v394, %v397
    %v408 = vmul.f32 %v407, 1.442695
    %v409 = vpow.pop %v408
    %v410 = vadd.f32 %v400, %v403
    %v411 = vadd.f32 %v410, %v406
    %v412 = vadd.f32 %v411, %v409
    %v413 = vrcp.pop %v412
    %v414 = vmul.f32 1.0, %v413
    %v415 = vmul.f32 %v400, %v414
    %v416 = vmul.f32 %v415, %v125
    %v417 = vmul.f32 %v403, %v414
    %v418 = vmul.f32 %v417, %v125
    %420 = vrot.lane.b32.xlu0 %v418, 120
    %v421 = vpop.permute.xlu0 %420
    %v423 = vadd.f32 %v416, %v421
    %v424 = vmul.f32 %v406, %v414
    %v425 = vmul.f32 %v424, %v125
    %427 = vrot.lane.b32.xlu0 %v425, 112
    %v428 = vpop.permute.xlu0 %427
    %v430 = vadd.f32 %v423, %v428
    %v431 = vmul.f32 %v409, %v414
    %v432 = vmul.f32 %v431, %v125
    %434 = vrot.lane.b32.xlu0 %v432, 104
    %v435 = vpop.permute.xlu0 %434
    %v437 = vadd.f32 %v430, %v435
    %439 = vrot.lane.b32.xlu0 %v206, 64
    %v440 = vpop.permute.xlu0 %439
    %443 = vrot.lane.b32.xlu0 %v285, 72
    %v444 = vpop.permute.xlu0 %443
    %447 = vrot.lane.b32.xlu0 %v361, 80
    %v448 = vpop.permute.xlu0 %447
    %451 = vrot.lane.b32.xlu0 %v437, 88
    %v452 = vpop.permute.xlu0 %451
    %v454 = vsel %vm135, %v440, %v444
    %vm455 = vcmask 130048
    %v456 = vsel %vm455, %v454, %v448
    %vm457 = vcmask 195584
    %v458 = vsel %vm457, %v456, %v452
    %v459 = vpack.c.bf16 %v458, %v458
    %v460 = vld [vmem:[#allocation7] sm:$0xf]
    %v461 = vld [vmem:[#allocation7 + $0x4] sm:$0xf]
    %v462 = vld [vmem:[#allocation7 + $0x8] sm:$0xf]
    %v463 = vld [vmem:[#allocation7 + $0xc] sm:$0xf]
    %v464 = vld [vmem:[%s4] sm:$0x1]
    %v466 = vlaneseq
    %v467 = vshrl.u32 %v466, 7
    %v468 = vsub.s32 0, %v467
    %v469 = vrot.slane %v464, %v468
    %v475 = vunpack.c.l.b16 %v460
    %v476 = vunpack.c.l.b16 %v461
    %v477 = vunpack.c.l.b16 %v462
    %v478 = vunpack.c.l.b16 %v463
    %v479 = vpack.c.b16 %v476, %v475
    %v480 = vpack.c.b16 %v478, %v477
    %v484 = vsel %vm86, %v459, 0
    %486 = vmatprep.subr.bf16.mxu0 0
    %487 = vmatpush1.bf16.msra.mxu0 %v479
    %488 = vmatprep.subr.bf16.mxu0 0
    %489 = vmatpush1.bf16.msra.mxu0 %v480
    %490 = vmatprep.subr.bf16.mxu0 0
    %491 = vmatpush1.bf16.msra.mxu0 0
    %492 = vmatprep.subr.bf16.mxu0 0
    %493 = vmatpush1.bf16.msra.mxu0 0
    %494 = vmatprep.subr.bf16.mxu0 0
    %495 = vmatpush1.bf16.msra.mxu0 0
    %496 = vmatprep.subr.bf16.mxu0 0
    %497 = vmatpush1.bf16.msra.mxu0 0
    %498 = vmatprep.subr.bf16.mxu0 0
    %499 = vmatpush1.bf16.msra.mxu0 0
    %500 = vmatprep.subr.bf16.mxu0 0
    %501 = vmatpush1.bf16.msra.mxu0 0
    %502 = vmatprep.subr.bf16.mxu0 0
    %503 = vmatpush1.bf16.msra.mxu0 0
    %504 = vmatprep.subr.bf16.mxu0 0
    %505 = vmatpush1.bf16.msra.mxu0 0
    %506 = vmatprep.subr.bf16.mxu0 0
    %507 = vmatpush1.bf16.msra.mxu0 0
    %508 = vmatprep.subr.bf16.mxu0 0
    %509 = vmatpush1.bf16.msra.mxu0 0
    %510 = vmatprep.subr.bf16.mxu0 0
    %511 = vmatpush1.bf16.msra.mxu0 0
    %512 = vmatprep.subr.bf16.mxu0 0
    %513 = vmatpush1.bf16.msra.mxu0 0
    %514 = vmatprep.subr.bf16.mxu0 0
    %515 = vmatpush1.bf16.msra.mxu0 0
    %516 = vmatprep.subr.bf16.mxu0 0
    %517 = vmatpush1.bf16.msra.mxu0 0
    %518 = vmatprep.mubr.bf16.mxu0 0
    %519 = vmatmul.mubr.bf16.gmra.mrb[0].mxu0 %v484
    %v520 = vpop.f32.mrb[0].mxu0
    %v521 = vadd.f32 %v469, %v520
    %v522 = vpop.f32.mrb[0].mxu0
    %v523 = vpop.f32.mrb[0].mxu0
    %v524 = vpop.f32.mrb[0].mxu0
    %525 = vdwg.mxu0
    %526 = vst.msk [vmem:[#allocation8] sm:$0xff] %vm86, %v521
    // Predicated region
    $region34: #{tpu_custom_call.1} parent=1 // pred_check
      _
    $region35: #{tpu_custom_call.1} parent=1 // pred_check_branch
      %528 = sbr.rel (0) target = $region37
    $region36: #{tpu_custom_call.1} parent=1 // pred_region
      %s530 = ssub.s32 128, 128
      %531 = vsyncadd [#allocation4], %s530
      %s533 = sshll.u32 [#allocation8], 4
      %s534 = int_to_ptr.vmem [resolvable:$true] %s533
      %536 = dma.vmem_to_hbm [thread:$0]  %s534, 128, %s5, [#allocation4]
    $region37: #{tpu_custom_call.1} parent=1 // pred_fallthru
      _
    // Predicated region
    $region38: #{tpu_custom_call.1} parent=1 // pred_check
      _
    $region39: #{tpu_custom_call.1} parent=1 // pred_check_branch
      %538 = sbr.rel (0) target = $region41
    $region40: #{tpu_custom_call.1} parent=1 // pred_region
      %539 = dma.done [#allocation4], 128
    $region41: #{tpu_custom_call.1} parent=1 // pred_fallthru
      _
    %540 = vsyncpa [#allocation3], 1
    %541 = vsyncpa [#allocation6], 1
    %542 = vsyncpa [#allocation4], 1

</llo_original>
